<compile_context>
chip_gen: v5e
topology: v5e:2x2
jax: 0.10.0
libtpu: 0.0.40
codegen_flags: <defaults>
</compile_context>

<pallas_src>
import math

import jax
import jax.numpy as jnp
from jax import lax
from jax.experimental import pallas as pl
from jax.experimental.pallas import tpu as pltpu


def _round_up(n, m):
    return ((n + m - 1) // m) * m


def rnn_kernel(x_ref, wih_ref, whh_ref, wfc_ref, bfc_ref, out_ref,
               *, seq_len, batch_pad):
    # x_ref:   (S*Bp, Dp) bf16  time-major, batch-padded input, col D_in == 1.0
    # wih_ref: (Dp, Hp)   bf16  W_ih^T zero-padded; row D_in holds (b_ih + b_hh)
    # whh_ref: (Hp, Hp)   bf16  W_hh^T zero-padded
    # wfc_ref: (Hp, Op)   f32   W_fc^T zero-padded
    # bfc_ref: (1, Op)    f32   B * b_fc on real classes, -1e30 on padded classes
    # out_ref: (S, Op)    f32   log-softmax rows (padded classes ~ -1e30)
    hp = whh_ref.shape[0]

    # One big input-projection matmul (bias already fused via ones column).
    # bf16 operands, f32 accumulation.
    xw = jnp.dot(x_ref[...], wih_ref[...],
                 preferred_element_type=jnp.float32)          # (S*Bp, Hp) f32

    whh = whh_ref[...]                                        # bf16, loop-invariant
    h = jnp.zeros((batch_pad, hp), dtype=jnp.float32)

    # Statically unrolled recurrence: per step only (bf16 cast) -> h @ W_hh^T
    # -> f32 add -> f32 tanh sit on the serial critical path.
    sum_rows = []
    for t in range(seq_len):
        xt = xw[t * batch_pad:(t + 1) * batch_pad, :]
        hw = jnp.dot(h.astype(jnp.bfloat16), whh,
                     preferred_element_type=jnp.float32)
        h = jnp.tanh(xt + hw)
        # Padded batch rows of h are exactly zero, so the full-row sum equals
        # the sum over the real batch.  Kept register-resident (no scratch).
        sum_rows.append(jnp.sum(h, axis=0, keepdims=True))    # (1, Hp) f32

    sumh = jnp.concatenate(sum_rows, axis=0)                  # (S, Hp) f32

    # sum_b (h W_fc^T + b_fc) == (sum_b h) W_fc^T + B * b_fc  (B folded into bfc).
    scores = (jnp.dot(sumh, wfc_ref[...], preferred_element_type=jnp.float32)
              + bfc_ref[...])                                 # (S, Op)

    # LogSoftmax(dim=1) on the lane-dense padded block; padded classes are at
    # ~-1e30 so exp() underflows to 0 and they don't affect normalization.
    m = jnp.max(scores, axis=1, keepdims=True)
    shifted = scores - m
    lse = jnp.log(jnp.sum(jnp.exp(shifted), axis=1, keepdims=True))
    out_ref[...] = shifted - lse


def make_rnn_forward(w_ih, w_hh, b_ih, b_hh, w_fc, b_fc, batch):
    """Pad / transpose / fold the (constant) weights once, return a jitted
    per-call forward that only preps x and launches the kernel."""
    H, D_in = w_ih.shape
    O = w_fc.shape[0]
    B = int(batch)

    Bp = _round_up(B, 8)              # sublane tile
    Dp = _round_up(D_in + 1, 128)     # +1 ones column carries the recurrent bias
    Hp = _round_up(H, 128)            # lane tile
    Op = _round_up(O, 128)            # lane-dense output block

    f32 = jnp.float32
    bf16 = jnp.bfloat16

    # ---- one-time weight prep (hoisted out of the per-call path) ----
    wih_aug = jnp.zeros((Dp, Hp), f32)
    wih_aug = wih_aug.at[:D_in, :H].set(jnp.transpose(w_ih).astype(f32))
    wih_aug = wih_aug.at[D_in, :H].set((b_ih + b_hh).astype(f32))
    wih_aug = wih_aug.astype(bf16)

    whh_p = (jnp.zeros((Hp, Hp), f32)
             .at[:H, :H].set(jnp.transpose(w_hh).astype(f32))).astype(bf16)
    wfc_p = jnp.zeros((Hp, Op), f32).at[:H, :O].set(jnp.transpose(w_fc).astype(f32))
    # B * b_fc on real classes; -1e30 masks padded classes out of the softmax.
    bfc_p = jnp.full((1, Op), -1e30, f32).at[0, :O].set(float(B) * b_fc.astype(f32))

    wih_aug, whh_p, wfc_p, bfc_p = jax.device_put((wih_aug, whh_p, wfc_p, bfc_p))

    vmem = pltpu.MemorySpace.VMEM

    @jax.jit
    def forward(x):
        # x: (B, S, D_in) batch_first.  Returns (S, O) log-probs.
        S = x.shape[1]

        def kernel(x_ref, wih_ref, whh_ref, wfc_ref, bfc_ref, out_ref):
            rnn_kernel(x_ref, wih_ref, whh_ref, wfc_ref, bfc_ref, out_ref,
                       seq_len=S, batch_pad=Bp)

        # Fused x prep: time-major transpose, ones bias column, pad, flatten, cast.
        x_t = jnp.transpose(x.astype(f32), (1, 0, 2))               # (S, B, D_in)
        ones = jnp.ones((S, B, 1), f32)
        x_aug = jnp.concatenate([x_t, ones], axis=2)                # (S, B, D_in+1)
        x_pad = jnp.pad(x_aug, ((0, 0), (0, Bp - B), (0, Dp - (D_in + 1))))
        x2d = x_pad.reshape(S * Bp, Dp).astype(bf16)                # (S*Bp, Dp)

        out_pad = pl.pallas_call(
            kernel,
            out_shape=jax.ShapeDtypeStruct((S, Op), f32),
            in_specs=[pl.BlockSpec(memory_space=vmem)] * 5,
            out_specs=pl.BlockSpec(memory_space=vmem),
        )(x2d, wih_aug, whh_p, wfc_p, bfc_p)

        return out_pad[:, :O]

    return forward


def reference_forward(x, w_ih, w_hh, b_ih, b_hh, w_fc, b_fc):
    """Pure-JAX mirror of the PyTorch forward (high-precision matmuls)."""
    B, S, _ = x.shape
    H = w_hh.shape[0]
    hi = lax.Precision.HIGHEST

    def step(h, xt):
        h_new = jnp.tanh(
            jnp.dot(xt, w_ih.T, precision=hi) + b_ih
            + jnp.dot(h, w_hh.T, precision=hi) + b_hh
        )
        return h_new, h_new

    xs = jnp.transpose(x, (1, 0, 2))                              # (S, B, D)
    _, hs = lax.scan(step, jnp.zeros((B, H), jnp.float32), xs)    # (S, B, H)
    out_seq = jnp.transpose(hs, (1, 0, 2))                        # (B, S, H)
    scores = jnp.sum(jnp.dot(out_seq, w_fc.T, precision=hi) + b_fc, axis=0)  # (S, O)
    return jax.nn.log_softmax(scores, axis=1)


if __name__ == "__main__":
    input_dim = 50
    hidden_dim = 64
    output_dim = 5
    batch = 2
    seq = 8

    key = jax.random.PRNGKey(0)
    ks = jax.random.split(key, 7)

    # PyTorch-style uniform(-1/sqrt(H), 1/sqrt(H)) init for both RNN and fc.
    bound = 1.0 / math.sqrt(hidden_dim)
    w_ih = jax.random.uniform(ks[0], (hidden_dim, input_dim), jnp.float32, -bound, bound)
    w_hh = jax.random.uniform(ks[1], (hidden_dim, hidden_dim), jnp.float32, -bound, bound)
    b_ih = jax.random.uniform(ks[2], (hidden_dim,), jnp.float32, -bound, bound)
    b_hh = jax.random.uniform(ks[3], (hidden_dim,), jnp.float32, -bound, bound)
    w_fc = jax.random.uniform(ks[4], (output_dim, hidden_dim), jnp.float32, -bound, bound)
    b_fc = jax.random.uniform(ks[5], (output_dim,), jnp.float32, -bound, bound)

    x = jax.random.normal(ks[6], (batch, seq, input_dim), jnp.float32)

    rnn_forward = make_rnn_forward(w_ih, w_hh, b_ih, b_hh, w_fc, b_fc, batch)
    out = rnn_forward(x)
    out = jax.block_until_ready(out)

    # Shape / finiteness / normalization checks.
    assert out.shape == (seq, output_dim)
    assert bool(jnp.all(jnp.isfinite(out)))
    row_prob_sums = jnp.sum(jnp.exp(out), axis=1)
    assert bool(jnp.allclose(row_prob_sums, 1.0, atol=1e-4))

    # Numerical check against a pure-JAX reference of the PyTorch forward
    # (tolerance covers the bf16-operand MXU matmuls).
    ref = reference_forward(x, w_ih, w_hh, b_ih, b_hh, w_fc, b_fc)
    max_err = float(jnp.max(jnp.abs(out - ref)))
    assert bool(jnp.allclose(out, ref, atol=5e-2, rtol=0.0)), max_err

    print("KERNEL_OK")
</pallas_src>

<mosaic_0001>
module attributes {stable_mosaic.version = 11 : i64} {
  func.func @kernel(%arg0: memref<64x128xbf16, #tpu.memory_space<vmem>>, %arg1: memref<128x128xbf16, #tpu.memory_space<vmem>>, %arg2: memref<128x128xbf16, #tpu.memory_space<vmem>>, %arg3: memref<128x128xf32, #tpu.memory_space<vmem>>, %arg4: memref<1x128xf32, #tpu.memory_space<vmem>>, %arg5: memref<8x128xf32, #tpu.memory_space<vmem>>) attributes {dimension_semantics = [], scalar_prefetch = 0 : i64, scratch_operands = 0 : i64, tpu.core_type = #tpu.core_type<tc>} {
    %c0 = arith.constant 0 : index
    %c0_0 = arith.constant 0 : index
    %0 = vector.load %arg0[%c0, %c0_0] : memref<64x128xbf16, #tpu.memory_space<vmem>>, vector<64x128xbf16>
    %c0_1 = arith.constant 0 : index
    %c0_2 = arith.constant 0 : index
    %1 = vector.load %arg1[%c0_1, %c0_2] : memref<128x128xbf16, #tpu.memory_space<vmem>>, vector<128x128xbf16>
    %cst = arith.constant dense<0.000000e+00> : vector<64x128xf32>
    %2 = tpu.matmul %0, %1, %cst {dimension_numbers = #tpu.dot_dimension_numbers<[1], [0], [0], [1], [0, 0, 1, 1], [], []>} : vector<64x128xbf16>, vector<128x128xbf16>, vector<64x128xf32> -> vector<64x128xf32>
    %c0_3 = arith.constant 0 : index
    %c0_4 = arith.constant 0 : index
    %3 = vector.load %arg2[%c0_3, %c0_4] : memref<128x128xbf16, #tpu.memory_space<vmem>>, vector<128x128xbf16>
    %cst_5 = arith.constant 0.000000e+00 : f32
    %4 = vector.broadcast %cst_5 : f32 to vector<8x128xf32>
    %5 = vector.extract_strided_slice %2 {offsets = [0, 0], sizes = [8, 128], strides = [1, 1]} : vector<64x128xf32> to vector<8x128xf32>
    %6 = arith.truncf %4 : vector<8x128xf32> to vector<8x128xbf16>
    %cst_6 = arith.constant dense<0.000000e+00> : vector<8x128xf32>
    %7 = tpu.matmul %6, %3, %cst_6 {dimension_numbers = #tpu.dot_dimension_numbers<[1], [0], [0], [1], [0, 0, 1, 1], [], []>} : vector<8x128xbf16>, vector<128x128xbf16>, vector<8x128xf32> -> vector<8x128xf32>
    %8 = arith.addf %5, %7 : vector<8x128xf32>
    %9 = math.tanh %8 : vector<8x128xf32>
    %cst_7 = arith.constant dense<0.000000e+00> : vector<128xf32>
    %10 = vector.multi_reduction <add>, %9, %cst_7 [0] : vector<8x128xf32> to vector<128xf32>
    %11 = vector.shape_cast %10 : vector<128xf32> to vector<1x128xf32>
    %12 = vector.extract_strided_slice %2 {offsets = [8, 0], sizes = [8, 128], strides = [1, 1]} : vector<64x128xf32> to vector<8x128xf32>
    %13 = arith.truncf %9 : vector<8x128xf32> to vector<8x128xbf16>
    %cst_8 = arith.constant dense<0.000000e+00> : vector<8x128xf32>
    %14 = tpu.matmul %13, %3, %cst_8 {dimension_numbers = #tpu.dot_dimension_numbers<[1], [0], [0], [1], [0, 0, 1, 1], [], []>} : vector<8x128xbf16>, vector<128x128xbf16>, vector<8x128xf32> -> vector<8x128xf32>
    %15 = arith.addf %12, %14 : vector<8x128xf32>
    %16 = math.tanh %15 : vector<8x128xf32>
    %cst_9 = arith.constant dense<0.000000e+00> : vector<128xf32>
    %17 = vector.multi_reduction <add>, %16, %cst_9 [0] : vector<8x128xf32> to vector<128xf32>
    %18 = vector.shape_cast %17 : vector<128xf32> to vector<1x128xf32>
    %19 = vector.extract_strided_slice %2 {offsets = [16, 0], sizes = [8, 128], strides = [1, 1]} : vector<64x128xf32> to vector<8x128xf32>
    %20 = arith.truncf %16 : vector<8x128xf32> to vector<8x128xbf16>
    %cst_10 = arith.constant dense<0.000000e+00> : vector<8x128xf32>
    %21 = tpu.matmul %20, %3, %cst_10 {dimension_numbers = #tpu.dot_dimension_numbers<[1], [0], [0], [1], [0, 0, 1, 1], [], []>} : vector<8x128xbf16>, vector<128x128xbf16>, vector<8x128xf32> -> vector<8x128xf32>
    %22 = arith.addf %19, %21 : vector<8x128xf32>
    %23 = math.tanh %22 : vector<8x128xf32>
    %cst_11 = arith.constant dense<0.000000e+00> : vector<128xf32>
    %24 = vector.multi_reduction <add>, %23, %cst_11 [0] : vector<8x128xf32> to vector<128xf32>
    %25 = vector.shape_cast %24 : vector<128xf32> to vector<1x128xf32>
    %26 = vector.extract_strided_slice %2 {offsets = [24, 0], sizes = [8, 128], strides = [1, 1]} : vector<64x128xf32> to vector<8x128xf32>
    %27 = arith.truncf %23 : vector<8x128xf32> to vector<8x128xbf16>
    %cst_12 = arith.constant dense<0.000000e+00> : vector<8x128xf32>
    %28 = tpu.matmul %27, %3, %cst_12 {dimension_numbers = #tpu.dot_dimension_numbers<[1], [0], [0], [1], [0, 0, 1, 1], [], []>} : vector<8x128xbf16>, vector<128x128xbf16>, vector<8x128xf32> -> vector<8x128xf32>
    %29 = arith.addf %26, %28 : vector<8x128xf32>
    %30 = math.tanh %29 : vector<8x128xf32>
    %cst_13 = arith.constant dense<0.000000e+00> : vector<128xf32>
    %31 = vector.multi_reduction <add>, %30, %cst_13 [0] : vector<8x128xf32> to vector<128xf32>
    %32 = vector.shape_cast %31 : vector<128xf32> to vector<1x128xf32>
    %33 = vector.extract_strided_slice %2 {offsets = [32, 0], sizes = [8, 128], strides = [1, 1]} : vector<64x128xf32> to vector<8x128xf32>
    %34 = arith.truncf %30 : vector<8x128xf32> to vector<8x128xbf16>
    %cst_14 = arith.constant dense<0.000000e+00> : vector<8x128xf32>
    %35 = tpu.matmul %34, %3, %cst_14 {dimension_numbers = #tpu.dot_dimension_numbers<[1], [0], [0], [1], [0, 0, 1, 1], [], []>} : vector<8x128xbf16>, vector<128x128xbf16>, vector<8x128xf32> -> vector<8x128xf32>
    %36 = arith.addf %33, %35 : vector<8x128xf32>
    %37 = math.tanh %36 : vector<8x128xf32>
    %cst_15 = arith.constant dense<0.000000e+00> : vector<128xf32>
    %38 = vector.multi_reduction <add>, %37, %cst_15 [0] : vector<8x128xf32> to vector<128xf32>
    %39 = vector.shape_cast %38 : vector<128xf32> to vector<1x128xf32>
    %40 = vector.extract_strided_slice %2 {offsets = [40, 0], sizes = [8, 128], strides = [1, 1]} : vector<64x128xf32> to vector<8x128xf32>
    %41 = arith.truncf %37 : vector<8x128xf32> to vector<8x128xbf16>
    %cst_16 = arith.constant dense<0.000000e+00> : vector<8x128xf32>
    %42 = tpu.matmul %41, %3, %cst_16 {dimension_numbers = #tpu.dot_dimension_numbers<[1], [0], [0], [1], [0, 0, 1, 1], [], []>} : vector<8x128xbf16>, vector<128x128xbf16>, vector<8x128xf32> -> vector<8x128xf32>
    %43 = arith.addf %40, %42 : vector<8x128xf32>
    %44 = math.tanh %43 : vector<8x128xf32>
    %cst_17 = arith.constant dense<0.000000e+00> : vector<128xf32>
    %45 = vector.multi_reduction <add>, %44, %cst_17 [0] : vector<8x128xf32> to vector<128xf32>
    %46 = vector.shape_cast %45 : vector<128xf32> to vector<1x128xf32>
    %47 = vector.extract_strided_slice %2 {offsets = [48, 0], sizes = [8, 128], strides = [1, 1]} : vector<64x128xf32> to vector<8x128xf32>
    %48 = arith.truncf %44 : vector<8x128xf32> to vector<8x128xbf16>
    %cst_18 = arith.constant dense<0.000000e+00> : vector<8x128xf32>
    %49 = tpu.matmul %48, %3, %cst_18 {dimension_numbers = #tpu.dot_dimension_numbers<[1], [0], [0], [1], [0, 0, 1, 1], [], []>} : vector<8x128xbf16>, vector<128x128xbf16>, vector<8x128xf32> -> vector<8x128xf32>
    %50 = arith.addf %47, %49 : vector<8x128xf32>
    %51 = math.tanh %50 : vector<8x128xf32>
    %cst_19 = arith.constant dense<0.000000e+00> : vector<128xf32>
    %52 = vector.multi_reduction <add>, %51, %cst_19 [0] : vector<8x128xf32> to vector<128xf32>
    %53 = vector.shape_cast %52 : vector<128xf32> to vector<1x128xf32>
    %54 = vector.extract_strided_slice %2 {offsets = [56, 0], sizes = [8, 128], strides = [1, 1]} : vector<64x128xf32> to vector<8x128xf32>
    %55 = arith.truncf %51 : vector<8x128xf32> to vector<8x128xbf16>
    %cst_20 = arith.constant dense<0.000000e+00> : vector<8x128xf32>
    %56 = tpu.matmul %55, %3, %cst_20 {dimension_numbers = #tpu.dot_dimension_numbers<[1], [0], [0], [1], [0, 0, 1, 1], [], []>} : vector<8x128xbf16>, vector<128x128xbf16>, vector<8x128xf32> -> vector<8x128xf32>
    %57 = arith.addf %54, %56 : vector<8x128xf32>
    %58 = math.tanh %57 : vector<8x128xf32>
    %cst_21 = arith.constant dense<0.000000e+00> : vector<128xf32>
    %59 = vector.multi_reduction <add>, %58, %cst_21 [0] : vector<8x128xf32> to vector<128xf32>
    %60 = vector.shape_cast %59 : vector<128xf32> to vector<1x128xf32>
    %61 = tpu.concatenate %11, %18, %25, %32, %39, %46, %53, %60 in 0 : vector<1x128xf32>, vector<1x128xf32>, vector<1x128xf32>, vector<1x128xf32>, vector<1x128xf32>, vector<1x128xf32>, vector<1x128xf32>, vector<1x128xf32> -> vector<8x128xf32>
    %c0_22 = arith.constant 0 : index
    %c0_23 = arith.constant 0 : index
    %62 = vector.load %arg3[%c0_22, %c0_23] : memref<128x128xf32, #tpu.memory_space<vmem>>, vector<128x128xf32>
    %cst_24 = arith.constant dense<0.000000e+00> : vector<8x128xf32>
    %63 = tpu.matmul %61, %62, %cst_24 {dimension_numbers = #tpu.dot_dimension_numbers<[1], [0], [0], [1], [0, 0, 1, 1], [], []>} : vector<8x128xf32>, vector<128x128xf32>, vector<8x128xf32> -> vector<8x128xf32>
    %c0_25 = arith.constant 0 : index
    %c0_26 = arith.constant 0 : index
    %64 = vector.load %arg4[%c0_25, %c0_26] : memref<1x128xf32, #tpu.memory_space<vmem>>, vector<1x128xf32>
    %65 = vector.broadcast %64 : vector<1x128xf32> to vector<8x128xf32>
    %66 = arith.addf %63, %65 : vector<8x128xf32>
    %cst_27 = arith.constant dense<0xFF800000> : vector<8xf32>
    %67 = vector.multi_reduction <maximumf>, %66, %cst_27 [1] : vector<8x128xf32> to vector<8xf32>
    %68 = vector.shape_cast %67 : vector<8xf32> to vector<8x1xf32>
    %69 = vector.broadcast %68 : vector<8x1xf32> to vector<8x128xf32>
    %70 = arith.subf %66, %69 : vector<8x128xf32>
    %71 = math.exp %70 : vector<8x128xf32>
    %cst_28 = arith.constant dense<0.000000e+00> : vector<8xf32>
    %72 = vector.multi_reduction <add>, %71, %cst_28 [1] : vector<8x128xf32> to vector<8xf32>
    %73 = vector.shape_cast %72 : vector<8xf32> to vector<8x1xf32>
    %74 = math.log %73 : vector<8x1xf32>
    %75 = vector.broadcast %74 : vector<8x1xf32> to vector<8x128xf32>
    %76 = arith.subf %70, %75 : vector<8x128xf32>
    %c0_29 = arith.constant 0 : index
    %c0_30 = arith.constant 0 : index
    %77 = vector.load %arg5[%c0_29, %c0_30] : memref<8x128xf32, #tpu.memory_space<vmem>>, vector<8x128xf32>
    tpu.vector_store %arg5[%c0_29, %c0_30], %76 {strides = array<i32>} : memref<8x128xf32, #tpu.memory_space<vmem>>, vector<8x128xf32>,
    return
  }
}

</mosaic_0001>

<llo_original>
// kernel: forward.1
$region0: #{forward.1}
  #allocation0 [shape = 'u32[]', space=smem, size = 0x4, offset = 0x4, fixed_abs, tag = 'smem constant byte address 0x4 - core index']
  #allocation1 [shape = 'u32[72,128]{1,0:T(1,128)}', space=vmem, size = 0x9000, scoped, tag = 'internal scratch']
  %s0 = inlined_call_operand.vmem [shape: bf16[64,128], index: 0, kind: input, shape index: {}]
  %s1 = inlined_call_operand.hbm [shape: bf16[128,128], index: 1, kind: input, shape index: {}]
  %s2 = inlined_call_operand.vmem [shape: bf16[128,128], index: 2, kind: input, shape index: {}]
  %s3 = inlined_call_operand.hbm [shape: f32[128,128], index: 3, kind: input, shape index: {}]
  %s4 = inlined_call_operand.vmem [shape: f32[1,128], index: 4, kind: input, shape index: {}]
  %s5 = inlined_call_operand.hbm [shape: f32[8,128], index: 5, kind: output, shape index: {}]
  %s6 = sld [smem:[#allocation0]]
  $region38: #{forward.1} parent=0
    _
  %s8 = ssub.s32 1, %s6
  %s9 = scalar_select 0, %s8, %s6
  $region1: #{forward.1} parent=0
    #allocation2 [shape = 'u8[32768]{0}', space=vmem, size = 0x8000, scoped, tag = 'input window, operand 1, single buffered']
    #allocation3 [shape = 's32[1]{0}', space=sflag, size = 0x4, scoped, tag = 'scoped memory for forward.1']
    #allocation4 [shape = 's32[1]{0}', space=sflag, size = 0x4, scoped, tag = 'scoped memory for forward.1']
    #allocation5 [shape = 'u8[65536]{0}', space=vmem, size = 0x10000, scoped, tag = 'input window, operand 3, single buffered']
    #allocation6 [shape = 's32[1]{0}', space=sflag, size = 0x4, scoped, tag = 'scoped memory for forward.1']
    #allocation7 [shape = 'u8[4096]{0}', space=vmem, size = 0x1000, scoped, tag = 'output window, operand 0, single buffered']
    %10 = vsyncpa [#allocation3], 0
    %11 = vsyncpa [#allocation6], 0
    %12 = vsyncpa [#allocation4], 0
    // Predicated region
    $region2: #{forward.1} parent=1 // pred_check
      _
    $region3: #{forward.1} parent=1 // pred_check_branch
      %14 = sbr.rel (0) target = $region5
    $region4: #{forward.1} parent=1 // pred_region
      _
    $region5: #{forward.1} parent=1 // pred_fallthru
      _
    // Predicated region
    $region6: #{forward.1} parent=1 // pred_check
      _
    $region7: #{forward.1} parent=1 // pred_check_branch
      %16 = sbr.rel (0) target = $region9
    $region8: #{forward.1} parent=1 // pred_region
      %18 = vsyncadd [#allocation3], 0
      %s19 = sshll.u32 %s1, 4
      %s20 = int_to_ptr.hbm [resolvable:$true] %s19
      %s21 = sshll.u32 [#allocation2], 4
      %s22 = int_to_ptr.vmem [resolvable:$true] %s21
      %27 = dma.hbm_to_vmem [thread:$0]  %s20, 1024, %s22, [#allocation3], 64, 64, 4
    $region9: #{forward.1} parent=1 // pred_fallthru
      _
    // Predicated region
    $region10: #{forward.1} parent=1 // pred_check
      _
    $region11: #{forward.1} parent=1 // pred_check_branch
      %29 = sbr.rel (0) target = $region13
    $region12: #{forward.1} parent=1 // pred_region
      _
    $region13: #{forward.1} parent=1 // pred_fallthru
      _
    // Predicated region
    $region14: #{forward.1} parent=1 // pred_check
      _
    $region15: #{forward.1} parent=1 // pred_check_branch
      %31 = sbr.rel (0) target = $region17
    $region16: #{forward.1} parent=1 // pred_region
      %33 = vsyncadd [#allocation6], 0
      %s34 = sshll.u32 %s3, 4
      %s35 = int_to_ptr.hbm [resolvable:$true] %s34
      %s36 = sshll.u32 [#allocation5], 4
      %s37 = int_to_ptr.vmem [resolvable:$true] %s36
      %42 = dma.hbm_to_vmem [thread:$0]  %s35, 2048, %s37, [#allocation6], 128, 128, 8
    $region17: #{forward.1} parent=1 // pred_fallthru
      _
    // Predicated region
    $region18: #{forward.1} parent=1 // pred_check
      _
    $region19: #{forward.1} parent=1 // pred_check_branch
      %44 = sbr.rel (0) target = $region21
    $region20: #{forward.1} parent=1 // pred_region
      _
    $region21: #{forward.1} parent=1 // pred_fallthru
      _
    // Predicated region
    $region22: #{forward.1} parent=1 // pred_check
      _
    $region23: #{forward.1} parent=1 // pred_check_branch
      %46 = sbr.rel (0) target = $region25
    $region24: #{forward.1} parent=1 // pred_region
      %48 = dma.done [#allocation3], 1024
    $region25: #{forward.1} parent=1 // pred_fallthru
      _
    // Predicated region
    $region26: #{forward.1} parent=1 // pred_check
      _
    $region27: #{forward.1} parent=1 // pred_check_branch
      %50 = sbr.rel (0) target = $region29
    $region28: #{forward.1} parent=1 // pred_region
      %52 = dma.done [#allocation6], 2048
    $region29: #{forward.1} parent=1 // pred_fallthru
      _
    %v54 = vld [vmem:[%s0] sm:$0xf]
    %v55 = vld [vmem:[%s0 + $0x4] sm:$0xf]
    %v56 = vld [vmem:[%s0 + $0x8] sm:$0xf]
    %v57 = vld [vmem:[%s0 + $0xc] sm:$0xf]
    %v58 = vld [vmem:[%s0 + $0x10] sm:$0xf]
    %v59 = vld [vmem:[%s0 + $0x14] sm:$0xf]
    %v60 = vld [vmem:[%s0 + $0x18] sm:$0xf]
    %v61 = vld [vmem:[%s0 + $0x1c] sm:$0xf]
    %v62 = vld [vmem:[#allocation2] sm:$0xf]
    %v63 = vld [vmem:[#allocation2 + $0x4] sm:$0xf]
    %v64 = vld [vmem:[#allocation2 + $0x8] sm:$0xf]
    %v65 = vld [vmem:[#allocation2 + $0xc] sm:$0xf]
    %v66 = vld [vmem:[#allocation2 + $0x10] sm:$0xf]
    %v67 = vld [vmem:[#allocation2 + $0x14] sm:$0xf]
    %v68 = vld [vmem:[#allocation2 + $0x18] sm:$0xf]
    %v69 = vld [vmem:[#allocation2 + $0x1c] sm:$0xf]
    %v70 = vld [vmem:[#allocation2 + $0x20] sm:$0xf]
    %v71 = vld [vmem:[#allocation2 + $0x24] sm:$0xf]
    %v72 = vld [vmem:[#allocation2 + $0x28] sm:$0xf]
    %v73 = vld [vmem:[#allocation2 + $0x2c] sm:$0xf]
    %v74 = vld [vmem:[#allocation2 + $0x30] sm:$0xf]
    %v75 = vld [vmem:[#allocation2 + $0x34] sm:$0xf]
    %v76 = vld [vmem:[#allocation2 + $0x38] sm:$0xf]
    %v77 = vld [vmem:[#allocation2 + $0x3c] sm:$0xf]
    %v86 = vunpack.c.l.b16 %v54
    %v87 = vunpack.c.l.b16 %v55
    %v88 = vunpack.c.l.b16 %v56
    %v89 = vunpack.c.l.b16 %v57
    %v90 = vunpack.c.l.b16 %v58
    %v91 = vunpack.c.l.b16 %v59
    %v92 = vunpack.c.l.b16 %v60
    %v93 = vunpack.c.l.b16 %v61
    %v94 = vpack.c.b16 %v87, %v86
    %v95 = vpack.c.b16 %v89, %v88
    %v96 = vpack.c.b16 %v91, %v90
    %v97 = vpack.c.b16 %v93, %v92
    %v118 = vunpack.c.l.b16 %v62
    %v119 = vunpack.c.l.b16 %v63
    %v120 = vunpack.c.l.b16 %v64
    %v121 = vunpack.c.l.b16 %v65
    %v122 = vunpack.c.l.b16 %v66
    %v123 = vunpack.c.l.b16 %v67
    %v124 = vunpack.c.l.b16 %v68
    %v125 = vunpack.c.l.b16 %v69
    %v126 = vunpack.c.l.b16 %v70
    %v127 = vunpack.c.l.b16 %v71
    %v128 = vunpack.c.l.b16 %v72
    %v129 = vunpack.c.l.b16 %v73
    %v130 = vunpack.c.l.b16 %v74
    %v131 = vunpack.c.l.b16 %v75
    %v132 = vunpack.c.l.b16 %v76
    %v133 = vunpack.c.l.b16 %v77
    %v134 = vpack.c.b16 %v119, %v118
    %v135 = vpack.c.b16 %v121, %v120
    %v136 = vpack.c.b16 %v123, %v122
    %v137 = vpack.c.b16 %v125, %v124
    %v138 = vpack.c.b16 %v127, %v126
    %v139 = vpack.c.b16 %v129, %v128
    %v140 = vpack.c.b16 %v131, %v130
    %v141 = vpack.c.b16 %v133, %v132
    %150 = vmatpush.bf16.msra.mxu0 %v141
    %151 = vmatpush.bf16.msra.mxu0 %v140
    %152 = vmatpush.bf16.msra.mxu0 %v139
    %153 = vmatpush.bf16.msra.mxu0 %v138
    %154 = vmatpush.bf16.msra.mxu0 %v137
    %155 = vmatpush.bf16.msra.mxu0 %v136
    %156 = vmatpush.bf16.msra.mxu0 %v135
    %157 = vmatpush.bf16.msra.mxu0 %v134
    %158 = vmatmul.bf16.gmra.mxu0 %v94
    %v159 = vpop.f32.mrf.mxu0
    %v160 = vadd.f32 0.0, %v159
    %v161 = vpop.f32.mrf.mxu0
    %v162 = vadd.f32 0.0, %v161
    %163 = vmatmul.bf16.gmra.mxu0 %v95
    %v164 = vpop.f32.mrf.mxu0
    %v165 = vadd.f32 0.0, %v164
    %v166 = vpop.f32.mrf.mxu0
    %v167 = vadd.f32 0.0, %v166
    %168 = vmatmul.bf16.gmra.mxu0 %v96
    %v169 = vpop.f32.mrf.mxu0
    %v170 = vadd.f32 0.0, %v169
    %v171 = vpop.f32.mrf.mxu0
    %v172 = vadd.f32 0.0, %v171
    %173 = vmatmul.bf16.gmra.mxu0 %v97
    %v174 = vpop.f32.mrf.mxu0
    %v175 = vadd.f32 0.0, %v174
    %v176 = vpop.f32.mrf.mxu0
    %v177 = vadd.f32 0.0, %v176
    %178 = vdwg.mxu0
    %v179 = vld [vmem:[%s2] sm:$0xf]
    %v180 = vld [vmem:[%s2 + $0x4] sm:$0xf]
    %v181 = vld [vmem:[%s2 + $0x8] sm:$0xf]
    %v182 = vld [vmem:[%s2 + $0xc] sm:$0xf]
    %v183 = vld [vmem:[%s2 + $0x10] sm:$0xf]
    %v184 = vld [vmem:[%s2 + $0x14] sm:$0xf]
    %v185 = vld [vmem:[%s2 + $0x18] sm:$0xf]
    %v186 = vld [vmem:[%s2 + $0x1c] sm:$0xf]
    %v187 = vld [vmem:[%s2 + $0x20] sm:$0xf]
    %v188 = vld [vmem:[%s2 + $0x24] sm:$0xf]
    %v189 = vld [vmem:[%s2 + $0x28] sm:$0xf]
    %v190 = vld [vmem:[%s2 + $0x2c] sm:$0xf]
    %v191 = vld [vmem:[%s2 + $0x30] sm:$0xf]
    %v192 = vld [vmem:[%s2 + $0x34] sm:$0xf]
    %v193 = vld [vmem:[%s2 + $0x38] sm:$0xf]
    %v194 = vld [vmem:[%s2 + $0x3c] sm:$0xf]
    %v211 = vunpack.c.l.b16 %v179
    %v212 = vunpack.c.l.b16 %v180
    %v213 = vunpack.c.l.b16 %v181
    %v214 = vunpack.c.l.b16 %v182
    %v215 = vunpack.c.l.b16 %v183
    %v216 = vunpack.c.l.b16 %v184
    %v217 = vunpack.c.l.b16 %v185
    %v218 = vunpack.c.l.b16 %v186
    %v219 = vunpack.c.l.b16 %v187
    %v220 = vunpack.c.l.b16 %v188
    %v221 = vunpack.c.l.b16 %v189
    %v222 = vunpack.c.l.b16 %v190
    %v223 = vunpack.c.l.b16 %v191
    %v224 = vunpack.c.l.b16 %v192
    %v225 = vunpack.c.l.b16 %v193
    %v226 = vunpack.c.l.b16 %v194
    %v227 = vpack.c.b16 %v212, %v211
    %v228 = vpack.c.b16 %v214, %v213
    %v229 = vpack.c.b16 %v216, %v215
    %v230 = vpack.c.b16 %v218, %v217
    %v231 = vpack.c.b16 %v220, %v219
    %v232 = vpack.c.b16 %v222, %v221
    %v233 = vpack.c.b16 %v224, %v223
    %v234 = vpack.c.b16 %v226, %v225
    %243 = vmatpush.bf16.msra.mxu0 %v234
    %244 = vmatpush.bf16.msra.mxu0 %v233
    %245 = vmatpush.bf16.msra.mxu0 %v232
    %246 = vmatpush.bf16.msra.mxu0 %v231
    %247 = vmatpush.bf16.msra.mxu0 %v230
    %248 = vmatpush.bf16.msra.mxu0 %v229
    %249 = vmatpush.bf16.msra.mxu0 %v228
    %250 = vmatpush.bf16.msra.mxu0 %v227
    %251 = vmatmul.bf16.gmra.mxu0 0
    %v252 = vpop.f32.mrf.mxu0
    %v253 = vadd.f32 0.0, %v252
    %v254 = vpop.f32.mrf.mxu0
    %255 = vdwg.mxu0
    %v256 = vadd.f32 %v160, %v253
    %v257 = vtanh.pop %v256
    %v258 = vrot.slane %v257, 4
    %v259 = vadd.f32 %v257, %v258
    %v260 = vrot.slane %v259, 2
    %v261 = vadd.f32 %v259, %v260
    %v262 = vrot.slane %v261, 1
    %v263 = vadd.f32 %v261, %v262
    %v264 = vpack.c.bf16 %v257, %v257
    %265 = vmatpush.bf16.msra.mxu0 %v234
    %266 = vmatpush.bf16.msra.mxu0 %v233
    %267 = vmatpush.bf16.msra.mxu0 %v232
    %268 = vmatpush.bf16.msra.mxu0 %v231
    %269 = vmatpush.bf16.msra.mxu0 %v230
    %270 = vmatpush.bf16.msra.mxu0 %v229
    %271 = vmatpush.bf16.msra.mxu0 %v228
    %272 = vmatpush.bf16.msra.mxu0 %v227
    %273 = vmatmul.bf16.gmra.mxu0 %v264
    %v274 = vpop.f32.mrf.mxu0
    %v275 = vadd.f32 0.0, %v274
    %v276 = vpop.f32.mrf.mxu0
    %277 = vdwg.mxu0
    %v278 = vadd.f32 %v162, %v275
    %v279 = vtanh.pop %v278
    %v280 = vrot.slane %v279, 4
    %v281 = vadd.f32 %v279, %v280
    %v282 = vrot.slane %v281, 2
    %v283 = vadd.f32 %v281, %v282
    %v284 = vrot.slane %v283, 1
    %v285 = vadd.f32 %v283, %v284
    %v286 = vpack.c.bf16 %v279, %v279
    %287 = vmatpush.bf16.msra.mxu0 %v234
    %288 = vmatpush.bf16.msra.mxu0 %v233
    %289 = vmatpush.bf16.msra.mxu0 %v232
    %290 = vmatpush.bf16.msra.mxu0 %v231
    %291 = vmatpush.bf16.msra.mxu0 %v230
    %292 = vmatpush.bf16.msra.mxu0 %v229
    %293 = vmatpush.bf16.msra.mxu0 %v228
    %294 = vmatpush.bf16.msra.mxu0 %v227
    %295 = vmatmul.bf16.gmra.mxu0 %v286
    %v296 = vpop.f32.mrf.mxu0
    %v297 = vadd.f32 0.0, %v296
    %v298 = vpop.f32.mrf.mxu0
    %299 = vdwg.mxu0
    %v300 = vadd.f32 %v165, %v297
    %v301 = vtanh.pop %v300
    %v302 = vrot.slane %v301, 4
    %v303 = vadd.f32 %v301, %v302
    %v304 = vrot.slane %v303, 2
    %v305 = vadd.f32 %v303, %v304
    %v306 = vrot.slane %v305, 1
    %v307 = vadd.f32 %v305, %v306
    %v308 = vpack.c.bf16 %v301, %v301
    %309 = vmatpush.bf16.msra.mxu0 %v234
    %310 = vmatpush.bf16.msra.mxu0 %v233
    %311 = vmatpush.bf16.msra.mxu0 %v232
    %312 = vmatpush.bf16.msra.mxu0 %v231
    %313 = vmatpush.bf16.msra.mxu0 %v230
    %314 = vmatpush.bf16.msra.mxu0 %v229
    %315 = vmatpush.bf16.msra.mxu0 %v228
    %316 = vmatpush.bf16.msra.mxu0 %v227
    %317 = vmatmul.bf16.gmra.mxu0 %v308
    %v318 = vpop.f32.mrf.mxu0
    %v319 = vadd.f32 0.0, %v318
    %v320 = vpop.f32.mrf.mxu0
    %321 = vdwg.mxu0
    %v322 = vadd.f32 %v167, %v319
    %v323 = vtanh.pop %v322
    %v324 = vrot.slane %v323, 4
    %v325 = vadd.f32 %v323, %v324
    %v326 = vrot.slane %v325, 2
    %v327 = vadd.f32 %v325, %v326
    %v328 = vrot.slane %v327, 1
    %v329 = vadd.f32 %v327, %v328
    %v330 = vpack.c.bf16 %v323, %v323
    %331 = vmatpush.bf16.msra.mxu0 %v234
    %332 = vmatpush.bf16.msra.mxu0 %v233
    %333 = vmatpush.bf16.msra.mxu0 %v232
    %334 = vmatpush.bf16.msra.mxu0 %v231
    %335 = vmatpush.bf16.msra.mxu0 %v230
    %336 = vmatpush.bf16.msra.mxu0 %v229
    %337 = vmatpush.bf16.msra.mxu0 %v228
    %338 = vmatpush.bf16.msra.mxu0 %v227
    %339 = vmatmul.bf16.gmra.mxu0 %v330
    %v340 = vpop.f32.mrf.mxu0
    %v341 = vadd.f32 0.0, %v340
    %v342 = vpop.f32.mrf.mxu0
    %343 = vdwg.mxu0
    %v344 = vadd.f32 %v170, %v341
    %v345 = vtanh.pop %v344
    %v346 = vrot.slane %v345, 4
    %v347 = vadd.f32 %v345, %v346
    %v348 = vrot.slane %v347, 2
    %v349 = vadd.f32 %v347, %v348
    %v350 = vrot.slane %v349, 1
    %v351 = vadd.f32 %v349, %v350
    %v352 = vpack.c.bf16 %v345, %v345
    %353 = vmatpush.bf16.msra.mxu0 %v234
    %354 = vmatpush.bf16.msra.mxu0 %v233
    %355 = vmatpush.bf16.msra.mxu0 %v232
    %356 = vmatpush.bf16.msra.mxu0 %v231
    %357 = vmatpush.bf16.msra.mxu0 %v230
    %358 = vmatpush.bf16.msra.mxu0 %v229
    %359 = vmatpush.bf16.msra.mxu0 %v228
    %360 = vmatpush.bf16.msra.mxu0 %v227
    %361 = vmatmul.bf16.gmra.mxu0 %v352
    %v362 = vpop.f32.mrf.mxu0
    %v363 = vadd.f32 0.0, %v362
    %v364 = vpop.f32.mrf.mxu0
    %365 = vdwg.mxu0
    %v366 = vadd.f32 %v172, %v363
    %v367 = vtanh.pop %v366
    %v368 = vrot.slane %v367, 4
    %v369 = vadd.f32 %v367, %v368
    %v370 = vrot.slane %v369, 2
    %v371 = vadd.f32 %v369, %v370
    %v372 = vrot.slane %v371, 1
    %v373 = vadd.f32 %v371, %v372
    %v374 = vpack.c.bf16 %v367, %v367
    %375 = vmatpush.bf16.msra.mxu0 %v234
    %376 = vmatpush.bf16.msra.mxu0 %v233
    %377 = vmatpush.bf16.msra.mxu0 %v232
    %378 = vmatpush.bf16.msra.mxu0 %v231
    %379 = vmatpush.bf16.msra.mxu0 %v230
    %380 = vmatpush.bf16.msra.mxu0 %v229
    %381 = vmatpush.bf16.msra.mxu0 %v228
    %382 = vmatpush.bf16.msra.mxu0 %v227
    %383 = vmatmul.bf16.gmra.mxu0 %v374
    %v384 = vpop.f32.mrf.mxu0
    %v385 = vadd.f32 0.0, %v384
    %v386 = vpop.f32.mrf.mxu0
    %387 = vdwg.mxu0
    %v388 = vadd.f32 %v175, %v385
    %v389 = vtanh.pop %v388
    %v390 = vrot.slane %v389, 4
    %v391 = vadd.f32 %v389, %v390
    %v392 = vrot.slane %v391, 2
    %v393 = vadd.f32 %v391, %v392
    %v394 = vrot.slane %v393, 1
    %v395 = vadd.f32 %v393, %v394
    %v396 = vpack.c.bf16 %v389, %v389
    %397 = vmatpush.bf16.msra.mxu0 %v234
    %398 = vmatpush.bf16.msra.mxu0 %v233
    %399 = vmatpush.bf16.msra.mxu0 %v232
    %400 = vmatpush.bf16.msra.mxu0 %v231
    %401 = vmatpush.bf16.msra.mxu0 %v230
    %402 = vmatpush.bf16.msra.mxu0 %v229
    %403 = vmatpush.bf16.msra.mxu0 %v228
    %404 = vmatpush.bf16.msra.mxu0 %v227
    %405 = vmatmul.bf16.gmra.mxu0 %v396
    %v406 = vpop.f32.mrf.mxu0
    %v407 = vadd.f32 0.0, %v406
    %v408 = vpop.f32.mrf.mxu0
    %409 = vdwg.mxu0
    %v410 = vadd.f32 %v177, %v407
    %v411 = vtanh.pop %v410
    %v412 = vrot.slane %v411, 4
    %v413 = vadd.f32 %v411, %v412
    %v414 = vrot.slane %v413, 2
    %v415 = vadd.f32 %v413, %v414
    %v416 = vrot.slane %v415, 1
    %v417 = vadd.f32 %v415, %v416
    %vm418 = vcmask 1040384
    %v419 = vsel %vm418, %v263, %v285
    %vm420 = vcmask 1041408
    %v421 = vsel %vm420, %v419, %v307
    %vm422 = vcmask 1042432
    %v423 = vsel %vm422, %v421, %v329
    %vm424 = vcmask 1043456
    %v425 = vsel %vm424, %v423, %v351
    %vm426 = vcmask 1044480
    %v427 = vsel %vm426, %v425, %v373
    %vm428 = vcmask 1045504
    %v429 = vsel %vm428, %v427, %v395
    %vm430 = vcmask 1046528
    %v431 = vsel %vm430, %v429, %v417
    %v432 = vld [vmem:[#allocation5] sm:$0xff]
    %v433 = vld [vmem:[#allocation5 + $0x8] sm:$0xff]
    %v434 = vld [vmem:[#allocation5 + $0x10] sm:$0xff]
    %v435 = vld [vmem:[#allocation5 + $0x18] sm:$0xff]
    %v436 = vld [vmem:[#allocation5 + $0x20] sm:$0xff]
    %v437 = vld [vmem:[#allocation5 + $0x28] sm:$0xff]
    %v438 = vld [vmem:[#allocation5 + $0x30] sm:$0xff]
    %v439 = vld [vmem:[#allocation5 + $0x38] sm:$0xff]
    %v440 = vld [vmem:[#allocation5 + $0x40] sm:$0xff]
    %v441 = vld [vmem:[#allocation5 + $0x48] sm:$0xff]
    %v442 = vld [vmem:[#allocation5 + $0x50] sm:$0xff]
    %v443 = vld [vmem:[#allocation5 + $0x58] sm:$0xff]
    %v444 = vld [vmem:[#allocation5 + $0x60] sm:$0xff]
    %v445 = vld [vmem:[#allocation5 + $0x68] sm:$0xff]
    %v446 = vld [vmem:[#allocation5 + $0x70] sm:$0xff]
    %v447 = vld [vmem:[#allocation5 + $0x78] sm:$0xff]
    %v448 = vld [vmem:[%s4] sm:$0x1]
    %v450 = vperm.slane %v448, 0
    %452 = vmatpush.msra.mxu0 %v447
    %453 = vmatpush.msra.mxu0 %v446
    %454 = vmatpush.msra.mxu0 %v445
    %455 = vmatpush.msra.mxu0 %v444
    %456 = vmatpush.msra.mxu0 %v443
    %457 = vmatpush.msra.mxu0 %v442
    %458 = vmatpush.msra.mxu0 %v441
    %459 = vmatpush.msra.mxu0 %v440
    %460 = vmatpush.msra.mxu0 %v439
    %461 = vmatpush.msra.mxu0 %v438
    %462 = vmatpush.msra.mxu0 %v437
    %463 = vmatpush.msra.mxu0 %v436
    %464 = vmatpush.msra.mxu0 %v435
    %465 = vmatpush.msra.mxu0 %v434
    %466 = vmatpush.msra.mxu0 %v433
    %467 = vmatpush.msra.mxu0 %v432
    %468 = vmatmul.f32.gmra.mxu0 %v431
    %v469 = vpop.f32.mrf.mxu0
    %v470 = vadd.f32 %v450, %v469
    %471 = vdwg.mxu0
    %472 = vmax.xlane.f32.xlu0 %v470
    %v473 = vpop.xlane.xlu0 %472
    %v474 = vsub.f32 %v470, %v473
    %v475 = vmul.f32 %v474, 1.442695
    %v476 = vpow.pop %v475
    %477 = vadd.xlane.f32.xlu0 %v476
    %v478 = vpop.xlane.xlu0 %477
    %v479 = vlog2.pop %v478
    %v480 = vmul.f32 %v479, 0.6931472
    %v481 = vsub.f32 %v474, %v480
    %482 = vst [vmem:[#allocation7] sm:$0xff] %v481
    // Predicated region
    $region30: #{forward.1} parent=1 // pred_check
      _
    $region31: #{forward.1} parent=1 // pred_check_branch
      %484 = sbr.rel (0) target = $region33
    $region32: #{forward.1} parent=1 // pred_region
      %486 = vsyncadd [#allocation4], 0
      %s488 = sshll.u32 [#allocation7], 4
      %s489 = int_to_ptr.vmem [resolvable:$true] %s488
      %s490 = sshll.u32 %s5, 4
      %s491 = int_to_ptr.hbm [resolvable:$true] %s490
      %493 = dma.vmem_to_hbm [thread:$0]  %s489, 128, %s491, [#allocation4]
    $region33: #{forward.1} parent=1 // pred_fallthru
      _
    // Predicated region
    $region34: #{forward.1} parent=1 // pred_check
      _
    $region35: #{forward.1} parent=1 // pred_check_branch
      %495 = sbr.rel (0) target = $region37
    $region36: #{forward.1} parent=1 // pred_region
      %497 = dma.done [#allocation4], 128
    $region37: #{forward.1} parent=1 // pred_fallthru
      _
    %498 = vsyncpa [#allocation3], 1
    %499 = vsyncpa [#allocation6], 1
    %500 = vsyncpa [#allocation4], 1

</llo_original>
